<compile_context>
chip_gen: v6e
topology: v6e:2x2x1
jax: 0.10.0
libtpu: 0.0.40
codegen_flags: <defaults>
</compile_context>

<pallas_src>
import math
import numpy as np
import jax
import jax.numpy as jnp
from jax.experimental import pallas as pl
from jax.experimental.pallas import tpu as pltpu


OBS_SHAPE = (7, 7, 3)                 # default MiniGrid observation space
N_ACTIONS = 3                         # simplified action space (n=3)
D_IN = int(np.prod(OBS_SHAPE))        # 147
H_EMB1, H_EMB2, H_HEAD = 100, 64, 32
OUT_LANES = 128                       # lane-dense output slab width
BLOCK_B = 8                           # full f32 sublane tile

# Packed-slab row offsets (all multiples of 8 so static sublane slices stay tile-aligned).
_R1 = 152                              # 147 inputs + 1 ones-lane + 3 pad rows
_O2 = _R1                              # layer-2 weight block (128 rows)
_O3 = _O2 + 128                        # fused actor/critic hidden block (128 rows)
_O4 = _O3 + 128                        # fused output block (128 rows)
R_TOTAL = _O4 + 128                    # 536 rows x 128 lanes x 4 B  ~= 268 KB


# ----------------------------- Pallas kernel -------------------------------

def _fused_fc_kernel(x_ref, p_ref, out_ref):
    f32 = jnp.float32
    x = x_ref[...]                                                   # (BB, 152); lane 147 == 1
    # Each layer is a single MXU pass; biases ride along via the constant-1 lane, and each
    # packed weight regenerates a "1" lane for the next layer (survives the ReLU).
    h1 = jnp.maximum(jnp.dot(x, p_ref[0:_R1, :], preferred_element_type=f32), 0.0)
    e = jnp.maximum(jnp.dot(h1, p_ref[_O2:_O3, :], preferred_element_type=f32), 0.0)
    hh = jnp.maximum(jnp.dot(e, p_ref[_O3:_O4, :], preferred_element_type=f32), 0.0)
    raw = jnp.dot(hh, p_ref[_O4:R_TOTAL, :], preferred_element_type=f32)

    # numerically-stable log-softmax restricted to the logit lanes (masked BEFORE the exp)
    lane = jax.lax.broadcasted_iota(jnp.int32, raw.shape, 1)
    is_logit = lane < N_ACTIONS
    masked = jnp.where(is_logit, raw, jnp.float32(-1e30))
    m = jnp.max(masked, axis=-1, keepdims=True)
    ex = jnp.exp(masked - m)                                          # dead lanes underflow to 0
    lse = m + jnp.log(jnp.sum(ex, axis=-1, keepdims=True))
    out_ref[...] = jnp.where(is_logit, raw - lse, raw)                # lane 3 keeps the raw value


def forward(packed, obs):
    """obs: (B, 7, 7, 3) NHWC (same tensor the PyTorch module receives).

    Returns (logp, value): log-probabilities parameterizing the policy distribution and the
    critic output squeezed to (B,).
    """
    B = obs.shape[0]
    # NHWC flatten; the packed first weight's rows were pre-permuted to match PyTorch's CHW
    # flatten, so no activation transpose is needed at runtime.
    x = obs.astype(jnp.float32).reshape(B, -1)                        # (B, 147)
    x_aug = jnp.concatenate(
        [x, jnp.ones((B, 1), jnp.float32), jnp.zeros((B, _R1 - D_IN - 1), jnp.float32)],
        axis=1)                                                       # (B, 152)
    b_pad = pl.cdiv(B, BLOCK_B) * BLOCK_B
    if b_pad != B:
        x_aug = jnp.pad(x_aug, ((0, b_pad - B), (0, 0)))
    grid = (b_pad // BLOCK_B,)

    slab = pl.pallas_call(
        _fused_fc_kernel,
        out_shape=jax.ShapeDtypeStruct((b_pad, OUT_LANES), jnp.float32),
        grid_spec=pltpu.PrefetchScalarGridSpec(
            num_scalar_prefetch=0,
            grid=grid,
            in_specs=[
                pl.BlockSpec((BLOCK_B, _R1), lambda i: (i, 0)),        # activations per block
                pl.BlockSpec((R_TOTAL, OUT_LANES), lambda i: (0, 0)),  # weights: resident
            ],
            out_specs=pl.BlockSpec((BLOCK_B, OUT_LANES), lambda i: (i, 0)),
        ),
        compiler_params=pltpu.CompilerParams(dimension_semantics=("parallel",)),
        cost_estimate=pl.CostEstimate(
            flops=2 * b_pad * OUT_LANES * (_R1 + 3 * 128),
            transcendentals=b_pad * (OUT_LANES + 1),
            bytes_accessed=4 * (b_pad * _R1 + R_TOTAL * OUT_LANES + b_pad * OUT_LANES),
        ),
    )(x_aug, packed)

    logp = slab[:B, :N_ACTIONS]
    value = slab[:B, N_ACTIONS]
    # TODO(synk): torch.distributions.Categorical has no Pallas equivalent; the distribution
    # is represented by its log-probabilities (logp).
    return logp, value


# ----------------------------- parameters ----------------------------------

def _uniform(key, shape, bound):
    return jax.random.uniform(key, shape, jnp.float32, -bound, bound)


def init_params(key):
    """Parameters in PyTorch layout (weight: (out, in), bias: (out,))."""
    keys = iter(jax.random.split(key, 16))

    def linear(d_in, d_out):
        b = 1.0 / math.sqrt(d_in)
        return _uniform(next(keys), (d_out, d_in), b), _uniform(next(keys), (d_out,), b)

    p = {}
    p["emb1_w"], p["emb1_b"] = linear(D_IN, H_EMB1)
    p["emb2_w"], p["emb2_b"] = linear(H_EMB1, H_EMB2)
    p["actor1_w"], p["actor1_b"] = linear(H_EMB2, H_HEAD)
    p["actor2_w"], p["actor2_b"] = linear(H_HEAD, N_ACTIONS)
    p["critic1_w"], p["critic1_b"] = linear(H_EMB2, H_HEAD)
    p["critic2_w"], p["critic2_b"] = linear(H_HEAD, 1)
    return p


def prepare_params(p):
    """One-time repack of PyTorch-layout params into a single (536, 128) f32 slab."""
    H, W, C = OBS_SHAPE
    # PyTorch flattens obs in (c,h,w) order after NHWC->NCHW transposes; permute the first
    # Linear's input rows so the kernel consumes the raw NHWC flatten directly.
    w1_chw = np.asarray(p["emb1_w"]).T                                  # (147, 100), rows (c,h,w)
    w1_hwc = (w1_chw.reshape(C, H, W, H_EMB1)
              .transpose(1, 2, 0, 3)
              .reshape(H * W * C, H_EMB1))                              # rows (h,w,c)

    slab = np.zeros((R_TOTAL, OUT_LANES), np.float32)

    # Layer 1: Linear(147,100); input lane 147 is the constant 1 -> its row holds the bias.
    slab[0:D_IN, 0:H_EMB1] = w1_hwc
    slab[D_IN, 0:H_EMB1] = np.asarray(p["emb1_b"])
    slab[D_IN, H_EMB1] = 1.0                                            # ones-lane generator (lane 100)

    # Layer 2: Linear(100,64); input ones-lane is 100.
    slab[_O2:_O2 + H_EMB1, 0:H_EMB2] = np.asarray(p["emb2_w"]).T
    slab[_O2 + H_EMB1, 0:H_EMB2] = np.asarray(p["emb2_b"])
    slab[_O2 + H_EMB1, H_EMB2] = 1.0                                    # ones-lane generator (lane 64)

    # Layer 3: fused actor/critic hidden Linear(64,32)+Linear(64,32); input ones-lane is 64.
    slab[_O3:_O3 + H_EMB2, 0:H_HEAD] = np.asarray(p["actor1_w"]).T
    slab[_O3:_O3 + H_EMB2, H_HEAD:2 * H_HEAD] = np.asarray(p["critic1_w"]).T
    slab[_O3 + H_EMB2, 0:H_HEAD] = np.asarray(p["actor1_b"])
    slab[_O3 + H_EMB2, H_HEAD:2 * H_HEAD] = np.asarray(p["critic1_b"])
    slab[_O3 + H_EMB2, 2 * H_HEAD] = 1.0                                # ones-lane generator (lane 64)

    # Layer 4: block-diagonal output; lanes 0..2 actor logits, lane 3 critic value.
    slab[_O4:_O4 + H_HEAD, 0:N_ACTIONS] = np.asarray(p["actor2_w"]).T
    slab[_O4 + H_HEAD:_O4 + 2 * H_HEAD, N_ACTIONS] = np.asarray(p["critic2_w"])[0, :]
    slab[_O4 + 2 * H_HEAD, 0:N_ACTIONS] = np.asarray(p["actor2_b"])
    slab[_O4 + 2 * H_HEAD, N_ACTIONS] = np.asarray(p["critic2_b"])[0]

    return jnp.asarray(slab)


# ----------------------------- reference (plain JAX, PyTorch semantics) ----

def reference_forward(p, obs):
    hi = jax.lax.Precision.HIGHEST
    B = obs.shape[0]
    x = jnp.transpose(obs, (0, 3, 1, 2)).reshape(B, -1).astype(jnp.float32)

    def lin(a, w, b):
        return jnp.dot(a, w.T, precision=hi) + b[None, :]

    h1 = jnp.maximum(lin(x, p["emb1_w"], p["emb1_b"]), 0.0)
    e = jnp.maximum(lin(h1, p["emb2_w"], p["emb2_b"]), 0.0)
    ah = jnp.maximum(lin(e, p["actor1_w"], p["actor1_b"]), 0.0)
    logits = lin(ah, p["actor2_w"], p["actor2_b"])
    logp = jax.nn.log_softmax(logits, axis=1)
    ch = jnp.maximum(lin(e, p["critic1_w"], p["critic1_b"]), 0.0)
    value = lin(ch, p["critic2_w"], p["critic2_b"])[:, 0]
    return logp, value


# ----------------------------- main -----------------------------------------

if __name__ == "__main__":
    key = jax.random.PRNGKey(0)
    pkey, okey1, okey2 = jax.random.split(key, 3)

    params = init_params(pkey)
    packed = prepare_params(params)

    fwd = jax.jit(forward)

    # B=2 (spec-sized) — padded to one 8-row block inside the wrapper.
    B = 2
    obs = jax.random.randint(okey1, (B,) + OBS_SHAPE, 0, 11).astype(jnp.float32)
    logp, value = fwd(packed, obs)
    jax.block_until_ready((logp, value))
    assert logp.shape == (B, N_ACTIONS)
    assert value.shape == (B,)
    ref_logp, ref_value = reference_forward(params, obs)
    np.testing.assert_allclose(np.asarray(logp), np.asarray(ref_logp), atol=1e-3, rtol=1e-3)
    np.testing.assert_allclose(np.asarray(value), np.asarray(ref_value), atol=1e-3, rtol=1e-3)

    # B=10 — exercises the batch grid (2 blocks) with the weight slab held VMEM-resident.
    B2 = 10
    obs2 = jax.random.randint(okey2, (B2,) + OBS_SHAPE, 0, 11).astype(jnp.float32)
    logp2, value2 = fwd(packed, obs2)
    jax.block_until_ready((logp2, value2))
    ref_logp2, ref_value2 = reference_forward(params, obs2)
    np.testing.assert_allclose(np.asarray(logp2), np.asarray(ref_logp2), atol=1e-3, rtol=1e-3)
    np.testing.assert_allclose(np.asarray(value2), np.asarray(ref_value2), atol=1e-3, rtol=1e-3)

    print("KERNEL_OK")
</pallas_src>

<mosaic_0001>
module attributes {stable_mosaic.version = 11 : i64} {
  func.func @_fused_fc_kernel(%arg0: i32, %arg1: memref<8x152xf32, #tpu.memory_space<vmem>>, %arg2: memref<536x128xf32, #tpu.memory_space<vmem>>, %arg3: memref<8x128xf32, #tpu.memory_space<vmem>>) attributes {dimension_semantics = [#tpu.dimension_semantics<parallel>], iteration_bounds = array<i64: 1>, scalar_prefetch = 0 : i64, scratch_operands = 0 : i64, tpu.core_type = #tpu.core_type<tc>, window_params = [{transform_indices = @transform_0, window_bounds = array<i64: 8, 152>}, {pipeline_mode = #tpu.pipeline_mode<synchronous>, transform_indices = @transform_1, window_bounds = array<i64: 536, 128>}, {transform_indices = @transform_2, window_bounds = array<i64: 8, 128>}]} {
    %c0 = arith.constant 0 : index
    %c0_0 = arith.constant 0 : index
    %0 = vector.load %arg1[%c0, %c0_0] : memref<8x152xf32, #tpu.memory_space<vmem>>, vector<8x152xf32>
    %c0_1 = arith.constant 0 : index
    %c0_2 = arith.constant 0 : index
    %1 = vector.load %arg2[%c0_1, %c0_2] : memref<536x128xf32, #tpu.memory_space<vmem>>, vector<152x128xf32>
    %cst = arith.constant dense<0.000000e+00> : vector<8x128xf32>
    %2 = tpu.matmul %0, %1, %cst {dimension_numbers = #tpu.dot_dimension_numbers<[1], [0], [0], [1], [0, 0, 1, 1], [], []>} : vector<8x152xf32>, vector<152x128xf32>, vector<8x128xf32> -> vector<8x128xf32>
    %cst_3 = arith.constant 0.000000e+00 : f32
    %3 = vector.broadcast %cst_3 : f32 to vector<8x128xf32>
    %4 = arith.maximumf %2, %3 : vector<8x128xf32>
    %c152 = arith.constant 152 : index
    %c0_4 = arith.constant 0 : index
    %5 = vector.load %arg2[%c152, %c0_4] : memref<536x128xf32, #tpu.memory_space<vmem>>, vector<128x128xf32>
    %cst_5 = arith.constant dense<0.000000e+00> : vector<8x128xf32>
    %6 = tpu.matmul %4, %5, %cst_5 {dimension_numbers = #tpu.dot_dimension_numbers<[1], [0], [0], [1], [0, 0, 1, 1], [], []>} : vector<8x128xf32>, vector<128x128xf32>, vector<8x128xf32> -> vector<8x128xf32>
    %cst_6 = arith.constant 0.000000e+00 : f32
    %7 = vector.broadcast %cst_6 : f32 to vector<8x128xf32>
    %8 = arith.maximumf %6, %7 : vector<8x128xf32>
    %c280 = arith.constant 280 : index
    %c0_7 = arith.constant 0 : index
    %9 = vector.load %arg2[%c280, %c0_7] : memref<536x128xf32, #tpu.memory_space<vmem>>, vector<128x128xf32>
    %cst_8 = arith.constant dense<0.000000e+00> : vector<8x128xf32>
    %10 = tpu.matmul %8, %9, %cst_8 {dimension_numbers = #tpu.dot_dimension_numbers<[1], [0], [0], [1], [0, 0, 1, 1], [], []>} : vector<8x128xf32>, vector<128x128xf32>, vector<8x128xf32> -> vector<8x128xf32>
    %cst_9 = arith.constant 0.000000e+00 : f32
    %11 = vector.broadcast %cst_9 : f32 to vector<8x128xf32>
    %12 = arith.maximumf %10, %11 : vector<8x128xf32>
    %c408 = arith.constant 408 : index
    %c0_10 = arith.constant 0 : index
    %13 = vector.load %arg2[%c408, %c0_10] : memref<536x128xf32, #tpu.memory_space<vmem>>, vector<128x128xf32>
    %cst_11 = arith.constant dense<0.000000e+00> : vector<8x128xf32>
    %14 = tpu.matmul %12, %13, %cst_11 {dimension_numbers = #tpu.dot_dimension_numbers<[1], [0], [0], [1], [0, 0, 1, 1], [], []>} : vector<8x128xf32>, vector<128x128xf32>, vector<8x128xf32> -> vector<8x128xf32>
    %15 = tpu.iota {dimensions = array<i32: 1>} : vector<8x128xi32>
    %c3_i32 = arith.constant 3 : i32
    %16 = vector.broadcast %c3_i32 : i32 to vector<8x128xi32>
    %17 = arith.cmpi slt, %15, %16 : vector<8x128xi32>
    %cst_12 = arith.constant -1.000000e+30 : f32
    %18 = vector.broadcast %cst_12 : f32 to vector<8x128xf32>
    %19 = arith.select %17, %14, %18 : vector<8x128xi1>, vector<8x128xf32>
    %cst_13 = arith.constant dense<0xFF800000> : vector<8xf32>
    %20 = vector.multi_reduction <maximumf>, %19, %cst_13 [1] : vector<8x128xf32> to vector<8xf32>
    %21 = vector.shape_cast %20 : vector<8xf32> to vector<8x1xf32>
    %22 = vector.broadcast %21 : vector<8x1xf32> to vector<8x128xf32>
    %23 = arith.subf %19, %22 : vector<8x128xf32>
    %24 = math.exp %23 : vector<8x128xf32>
    %cst_14 = arith.constant dense<0.000000e+00> : vector<8xf32>
    %25 = vector.multi_reduction <add>, %24, %cst_14 [1] : vector<8x128xf32> to vector<8xf32>
    %26 = vector.shape_cast %25 : vector<8xf32> to vector<8x1xf32>
    %27 = math.log %26 : vector<8x1xf32>
    %28 = arith.addf %21, %27 : vector<8x1xf32>
    %29 = vector.broadcast %28 : vector<8x1xf32> to vector<8x128xf32>
    %30 = arith.subf %14, %29 : vector<8x128xf32>
    %31 = arith.select %17, %30, %14 : vector<8x128xi1>, vector<8x128xf32>
    %c0_15 = arith.constant 0 : index
    %c0_16 = arith.constant 0 : index
    %32 = vector.load %arg3[%c0_15, %c0_16] : memref<8x128xf32, #tpu.memory_space<vmem>>, vector<8x128xf32>
    tpu.vector_store %arg3[%c0_15, %c0_16], %31 {strides = array<i32>} : memref<8x128xf32, #tpu.memory_space<vmem>>, vector<8x128xf32>,
    return
  }
  func.func @transform_0(%arg0: i32) -> (i32, i32) {
    %c0_i32 = arith.constant 0 : i32
    %c0_i32_0 = arith.constant 0 : i32
    return %arg0, %c0_i32 : i32, i32
  }
  func.func @transform_1(%arg0: i32) -> (i32, i32) {
    %c0_i32 = arith.constant 0 : i32
    %c0_i32_0 = arith.constant 0 : i32
    %c0_i32_1 = arith.constant 0 : i32
    return %c0_i32, %c0_i32_0 : i32, i32
  }
  func.func @transform_2(%arg0: i32) -> (i32, i32) {
    %c0_i32 = arith.constant 0 : i32
    %c0_i32_0 = arith.constant 0 : i32
    return %arg0, %c0_i32 : i32, i32
  }
}

</mosaic_0001>

<llo_original>
// kernel: forward.1
$region0: #{forward.1}
  #allocation0 [shape = 'u32[]', space=smem, size = 0x4, offset = 0x4, fixed_abs, tag = 'smem constant byte address 0x4 - core index']
  #allocation1 [shape = 'u32[144,128]{1,0:T(1,128)}', space=vmem, size = 0x12000, scoped, tag = 'internal scratch']
  %s0 = inlined_call_operand.vmem [shape: f32[8,152], index: 0, kind: input, shape index: {}]
  %s1 = inlined_call_operand.hbm [shape: f32[536,128], index: 1, kind: input, shape index: {}]
  %s2 = inlined_call_operand.vmem [shape: f32[8,128], index: 2, kind: output, shape index: {}]
  %s3 = sld [smem:[#allocation0]]
  $region22: #{forward.1} parent=0
    _
  %s5 = ssub.s32 1, %s3
  %s6 = scalar_select 0, %s5, %s3
  $region1: #{forward.1} parent=0
    #allocation2 [shape = 'u8[274432]{0}', space=vmem, size = 0x43000, scoped, tag = 'input window, operand 1, single buffered']
    #allocation3 [shape = 's32[1]{0}', space=sflag, size = 0x4, scoped, tag = 'scoped memory for forward.1']
    %7 = vsyncpa [#allocation3], 0
    // Predicated region
    $region2: #{forward.1} parent=1 // pred_check
      _
    $region3: #{forward.1} parent=1 // pred_check_branch
      %9 = sbr.rel (0) target = $region5
    $region4: #{forward.1} parent=1 // pred_region
      _
    $region5: #{forward.1} parent=1 // pred_fallthru
      _
    // Predicated region
    $region6: #{forward.1} parent=1 // pred_check
      _
    $region7: #{forward.1} parent=1 // pred_check_branch
      %11 = sbr.rel (0) target = $region9
    $region8: #{forward.1} parent=1 // pred_region
      %s13 = ssub.s32 8576, 8576
      %14 = vsyncadd [#allocation3], %s13
      %s15 = sshll.u32 [#allocation2], 4
      %s16 = int_to_ptr.vmem [resolvable:$true] %s15
      %21 = dma.hbm_to_vmem [thread:$0]  %s1, 8576, %s16, [#allocation3], 128, 128, 8
    $region9: #{forward.1} parent=1 // pred_fallthru
      _
    // Predicated region
    $region10: #{forward.1} parent=1 // pred_check
      _
    $region11: #{forward.1} parent=1 // pred_check_branch
      %23 = sbr.rel (0) target = $region13
    $region12: #{forward.1} parent=1 // pred_region
      %24 = dma.done [#allocation3], 8576
    $region13: #{forward.1} parent=1 // pred_fallthru
      _
    %v25 = vld [vmem:[%s0] sm:$0xff]
    %v26 = vld [vmem:[%s0 + $0x8] sm:$0xff]
    %v27 = vld [vmem:[#allocation2] sm:$0xff]
    %v28 = vld [vmem:[#allocation2 + $0x8] sm:$0xff]
    %v29 = vld [vmem:[#allocation2 + $0x10] sm:$0xff]
    %v30 = vld [vmem:[#allocation2 + $0x18] sm:$0xff]
    %v31 = vld [vmem:[#allocation2 + $0x20] sm:$0xff]
    %v32 = vld [vmem:[#allocation2 + $0x28] sm:$0xff]
    %v33 = vld [vmem:[#allocation2 + $0x30] sm:$0xff]
    %v34 = vld [vmem:[#allocation2 + $0x38] sm:$0xff]
    %v35 = vld [vmem:[#allocation2 + $0x40] sm:$0xff]
    %v36 = vld [vmem:[#allocation2 + $0x48] sm:$0xff]
    %v37 = vld [vmem:[#allocation2 + $0x50] sm:$0xff]
    %v38 = vld [vmem:[#allocation2 + $0x58] sm:$0xff]
    %v39 = vld [vmem:[#allocation2 + $0x60] sm:$0xff]
    %v40 = vld [vmem:[#allocation2 + $0x68] sm:$0xff]
    %v41 = vld [vmem:[#allocation2 + $0x70] sm:$0xff]
    %v42 = vld [vmem:[#allocation2 + $0x78] sm:$0xff]
    %v43 = vld [vmem:[#allocation2 + $0x80] sm:$0xff]
    %v44 = vld [vmem:[#allocation2 + $0x88] sm:$0xff]
    %v45 = vld [vmem:[#allocation2 + $0x90] sm:$0xff]
    %vm46 = vcmask 195584
    %v48 = vsel %vm46, %v26, 0
    %50 = vmatprep.subr.mxu0 0.0
    %51 = vmatpush1.msra.mxu0 %v42
    %52 = vmatprep.subr.mxu0 0.0
    %53 = vmatpush1.msra.mxu0 %v41
    %54 = vmatprep.subr.mxu0 0.0
    %55 = vmatpush1.msra.mxu0 %v40
    %56 = vmatprep.subr.mxu0 0.0
    %57 = vmatpush1.msra.mxu0 %v39
    %58 = vmatprep.subr.mxu0 0.0
    %59 = vmatpush1.msra.mxu0 %v38
    %60 = vmatprep.subr.mxu0 0.0
    %61 = vmatpush1.msra.mxu0 %v37
    %62 = vmatprep.subr.mxu0 0.0
    %63 = vmatpush1.msra.mxu0 %v36
    %64 = vmatprep.subr.mxu0 0.0
    %65 = vmatpush1.msra.mxu0 %v35
    %66 = vmatprep.subr.mxu0 0.0
    %67 = vmatpush1.msra.mxu0 %v34
    %68 = vmatprep.subr.mxu0 0.0
    %69 = vmatpush1.msra.mxu0 %v33
    %70 = vmatprep.subr.mxu0 0.0
    %71 = vmatpush1.msra.mxu0 %v32
    %72 = vmatprep.subr.mxu0 0.0
    %73 = vmatpush1.msra.mxu0 %v31
    %74 = vmatprep.subr.mxu0 0.0
    %75 = vmatpush1.msra.mxu0 %v30
    %76 = vmatprep.subr.mxu0 0.0
    %77 = vmatpush1.msra.mxu0 %v29
    %78 = vmatprep.subr.mxu0 0.0
    %79 = vmatpush1.msra.mxu0 %v28
    %80 = vmatprep.subr.mxu0 0.0
    %81 = vmatpush1.msra.mxu0 %v27
    %82 = vmatprep.subr.mxu0 0.0
    %83 = vmatpush2.msra.mxu0 0.0
    %84 = vmatprep.subr.mxu0 0.0
    %85 = vmatpush2.msra.mxu0 0.0
    %86 = vmatprep.subr.mxu0 0.0
    %87 = vmatpush2.msra.mxu0 0.0
    %88 = vmatprep.subr.mxu0 0.0
    %89 = vmatpush2.msra.mxu0 0.0
    %90 = vmatprep.subr.mxu0 0.0
    %91 = vmatpush2.msra.mxu0 0.0
    %92 = vmatprep.subr.mxu0 0.0
    %93 = vmatpush2.msra.mxu0 0.0
    %94 = vmatprep.subr.mxu0 0.0
    %95 = vmatpush2.msra.mxu0 0.0
    %96 = vmatprep.subr.mxu0 0.0
    %97 = vmatpush2.msra.mxu0 0.0
    %98 = vmatprep.subr.mxu0 0.0
    %99 = vmatpush2.msra.mxu0 0.0
    %100 = vmatprep.subr.mxu0 0.0
    %101 = vmatpush2.msra.mxu0 0.0
    %102 = vmatprep.subr.mxu0 0.0
    %103 = vmatpush2.msra.mxu0 0.0
    %104 = vmatprep.subr.mxu0 0.0
    %105 = vmatpush2.msra.mxu0 0.0
    %106 = vmatprep.subr.mxu0 0.0
    %107 = vmatpush2.msra.mxu0 0.0
    %108 = vmatprep.subr.mxu0 0.0
    %109 = vmatpush2.msra.mxu0 %v45
    %110 = vmatprep.subr.mxu0 0.0
    %111 = vmatpush2.msra.mxu0 %v44
    %112 = vmatprep.subr.mxu0 0.0
    %113 = vmatpush2.msra.mxu0 %v43
    %114 = vmatprep.mubr.f32.mxu0 %v48
    %115 = vmatmul.mubr.f32.gmra.mxu0 %v25
    %v116 = vpop.f32.mrf.mxu0
    %v117 = vadd.f32 0.0, %v116
    %v118 = vpop.f32.mrf.mxu0
    %119 = vdwg.mxu0
    %v120 = vmax.f32 %v117, 0.0
    %v121 = vld [vmem:[#allocation2 + $0x98] sm:$0xff]
    %v122 = vld [vmem:[#allocation2 + $0xa0] sm:$0xff]
    %v123 = vld [vmem:[#allocation2 + $0xa8] sm:$0xff]
    %v124 = vld [vmem:[#allocation2 + $0xb0] sm:$0xff]
    %v125 = vld [vmem:[#allocation2 + $0xb8] sm:$0xff]
    %v126 = vld [vmem:[#allocation2 + $0xc0] sm:$0xff]
    %v127 = vld [vmem:[#allocation2 + $0xc8] sm:$0xff]
    %v128 = vld [vmem:[#allocation2 + $0xd0] sm:$0xff]
    %v129 = vld [vmem:[#allocation2 + $0xd8] sm:$0xff]
    %v130 = vld [vmem:[#allocation2 + $0xe0] sm:$0xff]
    %v131 = vld [vmem:[#allocation2 + $0xe8] sm:$0xff]
    %v132 = vld [vmem:[#allocation2 + $0xf0] sm:$0xff]
    %v133 = vld [vmem:[#allocation2 + $0xf8] sm:$0xff]
    %v134 = vld [vmem:[#allocation2 + $0x100] sm:$0xff]
    %v135 = vld [vmem:[#allocation2 + $0x108] sm:$0xff]
    %v136 = vld [vmem:[#allocation2 + $0x110] sm:$0xff]
    %137 = vmatprep.subr.mxu0 0.0
    %138 = vmatpush1.msra.mxu0 %v136
    %139 = vmatprep.subr.mxu0 0.0
    %140 = vmatpush1.msra.mxu0 %v135
    %141 = vmatprep.subr.mxu0 0.0
    %142 = vmatpush1.msra.mxu0 %v134
    %143 = vmatprep.subr.mxu0 0.0
    %144 = vmatpush1.msra.mxu0 %v133
    %145 = vmatprep.subr.mxu0 0.0
    %146 = vmatpush1.msra.mxu0 %v132
    %147 = vmatprep.subr.mxu0 0.0
    %148 = vmatpush1.msra.mxu0 %v131
    %149 = vmatprep.subr.mxu0 0.0
    %150 = vmatpush1.msra.mxu0 %v130
    %151 = vmatprep.subr.mxu0 0.0
    %152 = vmatpush1.msra.mxu0 %v129
    %153 = vmatprep.subr.mxu0 0.0
    %154 = vmatpush1.msra.mxu0 %v128
    %155 = vmatprep.subr.mxu0 0.0
    %156 = vmatpush1.msra.mxu0 %v127
    %157 = vmatprep.subr.mxu0 0.0
    %158 = vmatpush1.msra.mxu0 %v126
    %159 = vmatprep.subr.mxu0 0.0
    %160 = vmatpush1.msra.mxu0 %v125
    %161 = vmatprep.subr.mxu0 0.0
    %162 = vmatpush1.msra.mxu0 %v124
    %163 = vmatprep.subr.mxu0 0.0
    %164 = vmatpush1.msra.mxu0 %v123
    %165 = vmatprep.subr.mxu0 0.0
    %166 = vmatpush1.msra.mxu0 %v122
    %167 = vmatprep.subr.mxu0 0.0
    %168 = vmatpush1.msra.mxu0 %v121
    %169 = vmatprep.subr.mxu0 0.0
    %170 = vmatpush2.msra.mxu0 0.0
    %171 = vmatprep.subr.mxu0 0.0
    %172 = vmatpush2.msra.mxu0 0.0
    %173 = vmatprep.subr.mxu0 0.0
    %174 = vmatpush2.msra.mxu0 0.0
    %175 = vmatprep.subr.mxu0 0.0
    %176 = vmatpush2.msra.mxu0 0.0
    %177 = vmatprep.subr.mxu0 0.0
    %178 = vmatpush2.msra.mxu0 0.0
    %179 = vmatprep.subr.mxu0 0.0
    %180 = vmatpush2.msra.mxu0 0.0
    %181 = vmatprep.subr.mxu0 0.0
    %182 = vmatpush2.msra.mxu0 0.0
    %183 = vmatprep.subr.mxu0 0.0
    %184 = vmatpush2.msra.mxu0 0.0
    %185 = vmatprep.subr.mxu0 0.0
    %186 = vmatpush2.msra.mxu0 0.0
    %187 = vmatprep.subr.mxu0 0.0
    %188 = vmatpush2.msra.mxu0 0.0
    %189 = vmatprep.subr.mxu0 0.0
    %190 = vmatpush2.msra.mxu0 0.0
    %191 = vmatprep.subr.mxu0 0.0
    %192 = vmatpush2.msra.mxu0 0.0
    %193 = vmatprep.subr.mxu0 0.0
    %194 = vmatpush2.msra.mxu0 0.0
    %195 = vmatprep.subr.mxu0 0.0
    %196 = vmatpush2.msra.mxu0 0.0
    %197 = vmatprep.subr.mxu0 0.0
    %198 = vmatpush2.msra.mxu0 0.0
    %199 = vmatprep.subr.mxu0 0.0
    %200 = vmatpush2.msra.mxu0 0.0
    %201 = vmatprep.mubr.f32.mxu0 0.0
    %202 = vmatmul.mubr.f32.gmra.mxu0 %v120
    %v203 = vpop.f32.mrf.mxu0
    %v204 = vadd.f32 0.0, %v203
    %v205 = vpop.f32.mrf.mxu0
    %206 = vdwg.mxu0
    %v207 = vmax.f32 %v204, 0.0
    %v208 = vld [vmem:[#allocation2 + $0x118] sm:$0xff]
    %v209 = vld [vmem:[#allocation2 + $0x120] sm:$0xff]
    %v210 = vld [vmem:[#allocation2 + $0x128] sm:$0xff]
    %v211 = vld [vmem:[#allocation2 + $0x130] sm:$0xff]
    %v212 = vld [vmem:[#allocation2 + $0x138] sm:$0xff]
    %v213 = vld [vmem:[#allocation2 + $0x140] sm:$0xff]
    %v214 = vld [vmem:[#allocation2 + $0x148] sm:$0xff]
    %v215 = vld [vmem:[#allocation2 + $0x150] sm:$0xff]
    %v216 = vld [vmem:[#allocation2 + $0x158] sm:$0xff]
    %v217 = vld [vmem:[#allocation2 + $0x160] sm:$0xff]
    %v218 = vld [vmem:[#allocation2 + $0x168] sm:$0xff]
    %v219 = vld [vmem:[#allocation2 + $0x170] sm:$0xff]
    %v220 = vld [vmem:[#allocation2 + $0x178] sm:$0xff]
    %v221 = vld [vmem:[#allocation2 + $0x180] sm:$0xff]
    %v222 = vld [vmem:[#allocation2 + $0x188] sm:$0xff]
    %v223 = vld [vmem:[#allocation2 + $0x190] sm:$0xff]
    %224 = vmatprep.subr.mxu0 0.0
    %225 = vmatpush1.msra.mxu0 %v223
    %226 = vmatprep.subr.mxu0 0.0
    %227 = vmatpush1.msra.mxu0 %v222
    %228 = vmatprep.subr.mxu0 0.0
    %229 = vmatpush1.msra.mxu0 %v221
    %230 = vmatprep.subr.mxu0 0.0
    %231 = vmatpush1.msra.mxu0 %v220
    %232 = vmatprep.subr.mxu0 0.0
    %233 = vmatpush1.msra.mxu0 %v219
    %234 = vmatprep.subr.mxu0 0.0
    %235 = vmatpush1.msra.mxu0 %v218
    %236 = vmatprep.subr.mxu0 0.0
    %237 = vmatpush1.msra.mxu0 %v217
    %238 = vmatprep.subr.mxu0 0.0
    %239 = vmatpush1.msra.mxu0 %v216
    %240 = vmatprep.subr.mxu0 0.0
    %241 = vmatpush1.msra.mxu0 %v215
    %242 = vmatprep.subr.mxu0 0.0
    %243 = vmatpush1.msra.mxu0 %v214
    %244 = vmatprep.subr.mxu0 0.0
    %245 = vmatpush1.msra.mxu0 %v213
    %246 = vmatprep.subr.mxu0 0.0
    %247 = vmatpush1.msra.mxu0 %v212
    %248 = vmatprep.subr.mxu0 0.0
    %249 = vmatpush1.msra.mxu0 %v211
    %250 = vmatprep.subr.mxu0 0.0
    %251 = vmatpush1.msra.mxu0 %v210
    %252 = vmatprep.subr.mxu0 0.0
    %253 = vmatpush1.msra.mxu0 %v209
    %254 = vmatprep.subr.mxu0 0.0
    %255 = vmatpush1.msra.mxu0 %v208
    %256 = vmatprep.subr.mxu0 0.0
    %257 = vmatpush2.msra.mxu0 0.0
    %258 = vmatprep.subr.mxu0 0.0
    %259 = vmatpush2.msra.mxu0 0.0
    %260 = vmatprep.subr.mxu0 0.0
    %261 = vmatpush2.msra.mxu0 0.0
    %262 = vmatprep.subr.mxu0 0.0
    %263 = vmatpush2.msra.mxu0 0.0
    %264 = vmatprep.subr.mxu0 0.0
    %265 = vmatpush2.msra.mxu0 0.0
    %266 = vmatprep.subr.mxu0 0.0
    %267 = vmatpush2.msra.mxu0 0.0
    %268 = vmatprep.subr.mxu0 0.0
    %269 = vmatpush2.msra.mxu0 0.0
    %270 = vmatprep.subr.mxu0 0.0
    %271 = vmatpush2.msra.mxu0 0.0
    %272 = vmatprep.subr.mxu0 0.0
    %273 = vmatpush2.msra.mxu0 0.0
    %274 = vmatprep.subr.mxu0 0.0
    %275 = vmatpush2.msra.mxu0 0.0
    %276 = vmatprep.subr.mxu0 0.0
    %277 = vmatpush2.msra.mxu0 0.0
    %278 = vmatprep.subr.mxu0 0.0
    %279 = vmatpush2.msra.mxu0 0.0
    %280 = vmatprep.subr.mxu0 0.0
    %281 = vmatpush2.msra.mxu0 0.0
    %282 = vmatprep.subr.mxu0 0.0
    %283 = vmatpush2.msra.mxu0 0.0
    %284 = vmatprep.subr.mxu0 0.0
    %285 = vmatpush2.msra.mxu0 0.0
    %286 = vmatprep.subr.mxu0 0.0
    %287 = vmatpush2.msra.mxu0 0.0
    %288 = vmatprep.mubr.f32.mxu0 0.0
    %289 = vmatmul.mubr.f32.gmra.mxu0 %v207
    %v290 = vpop.f32.mrf.mxu0
    %v291 = vadd.f32 0.0, %v290
    %v292 = vpop.f32.mrf.mxu0
    %293 = vdwg.mxu0
    %v294 = vmax.f32 %v291, 0.0
    %v295 = vld [vmem:[#allocation2 + $0x198] sm:$0xff]
    %v296 = vld [vmem:[#allocation2 + $0x1a0] sm:$0xff]
    %v297 = vld [vmem:[#allocation2 + $0x1a8] sm:$0xff]
    %v298 = vld [vmem:[#allocation2 + $0x1b0] sm:$0xff]
    %v299 = vld [vmem:[#allocation2 + $0x1b8] sm:$0xff]
    %v300 = vld [vmem:[#allocation2 + $0x1c0] sm:$0xff]
    %v301 = vld [vmem:[#allocation2 + $0x1c8] sm:$0xff]
    %v302 = vld [vmem:[#allocation2 + $0x1d0] sm:$0xff]
    %v303 = vld [vmem:[#allocation2 + $0x1d8] sm:$0xff]
    %v304 = vld [vmem:[#allocation2 + $0x1e0] sm:$0xff]
    %v305 = vld [vmem:[#allocation2 + $0x1e8] sm:$0xff]
    %v306 = vld [vmem:[#allocation2 + $0x1f0] sm:$0xff]
    %v307 = vld [vmem:[#allocation2 + $0x1f8] sm:$0xff]
    %v308 = vld [vmem:[#allocation2 + $0x200] sm:$0xff]
    %v309 = vld [vmem:[#allocation2 + $0x208] sm:$0xff]
    %v310 = vld [vmem:[#allocation2 + $0x210] sm:$0xff]
    %311 = vmatprep.subr.mxu0 0.0
    %312 = vmatpush1.msra.mxu0 %v310
    %313 = vmatprep.subr.mxu0 0.0
    %314 = vmatpush1.msra.mxu0 %v309
    %315 = vmatprep.subr.mxu0 0.0
    %316 = vmatpush1.msra.mxu0 %v308
    %317 = vmatprep.subr.mxu0 0.0
    %318 = vmatpush1.msra.mxu0 %v307
    %319 = vmatprep.subr.mxu0 0.0
    %320 = vmatpush1.msra.mxu0 %v306
    %321 = vmatprep.subr.mxu0 0.0
    %322 = vmatpush1.msra.mxu0 %v305
    %323 = vmatprep.subr.mxu0 0.0
    %324 = vmatpush1.msra.mxu0 %v304
    %325 = vmatprep.subr.mxu0 0.0
    %326 = vmatpush1.msra.mxu0 %v303
    %327 = vmatprep.subr.mxu0 0.0
    %328 = vmatpush1.msra.mxu0 %v302
    %329 = vmatprep.subr.mxu0 0.0
    %330 = vmatpush1.msra.mxu0 %v301
    %331 = vmatprep.subr.mxu0 0.0
    %332 = vmatpush1.msra.mxu0 %v300
    %333 = vmatprep.subr.mxu0 0.0
    %334 = vmatpush1.msra.mxu0 %v299
    %335 = vmatprep.subr.mxu0 0.0
    %336 = vmatpush1.msra.mxu0 %v298
    %337 = vmatprep.subr.mxu0 0.0
    %338 = vmatpush1.msra.mxu0 %v297
    %339 = vmatprep.subr.mxu0 0.0
    %340 = vmatpush1.msra.mxu0 %v296
    %341 = vmatprep.subr.mxu0 0.0
    %342 = vmatpush1.msra.mxu0 %v295
    %343 = vmatprep.subr.mxu0 0.0
    %344 = vmatpush2.msra.mxu0 0.0
    %345 = vmatprep.subr.mxu0 0.0
    %346 = vmatpush2.msra.mxu0 0.0
    %347 = vmatprep.subr.mxu0 0.0
    %348 = vmatpush2.msra.mxu0 0.0
    %349 = vmatprep.subr.mxu0 0.0
    %350 = vmatpush2.msra.mxu0 0.0
    %351 = vmatprep.subr.mxu0 0.0
    %352 = vmatpush2.msra.mxu0 0.0
    %353 = vmatprep.subr.mxu0 0.0
    %354 = vmatpush2.msra.mxu0 0.0
    %355 = vmatprep.subr.mxu0 0.0
    %356 = vmatpush2.msra.mxu0 0.0
    %357 = vmatprep.subr.mxu0 0.0
    %358 = vmatpush2.msra.mxu0 0.0
    %359 = vmatprep.subr.mxu0 0.0
    %360 = vmatpush2.msra.mxu0 0.0
    %361 = vmatprep.subr.mxu0 0.0
    %362 = vmatpush2.msra.mxu0 0.0
    %363 = vmatprep.subr.mxu0 0.0
    %364 = vmatpush2.msra.mxu0 0.0
    %365 = vmatprep.subr.mxu0 0.0
    %366 = vmatpush2.msra.mxu0 0.0
    %367 = vmatprep.subr.mxu0 0.0
    %368 = vmatpush2.msra.mxu0 0.0
    %369 = vmatprep.subr.mxu0 0.0
    %370 = vmatpush2.msra.mxu0 0.0
    %371 = vmatprep.subr.mxu0 0.0
    %372 = vmatpush2.msra.mxu0 0.0
    %373 = vmatprep.subr.mxu0 0.0
    %374 = vmatpush2.msra.mxu0 0.0
    %375 = vmatprep.mubr.f32.mxu0 0.0
    %376 = vmatmul.mubr.f32.gmra.mxu0 %v294
    %v377 = vpop.f32.mrf.mxu0
    %v378 = vadd.f32 0.0, %v377
    %v379 = vpop.f32.mrf.mxu0
    %380 = vdwg.mxu0
    %v381 = vlaneseq
    %v382 = vand.u32 %v381, 127
    %vm383 = vcmp.lt.s32.totalorder %v382, 3
    %v384 = vsel %vm383, %v378, -1e+30
    %385 = vmax.xlane.f32.xlu0 %v384
    %v386 = vpop.xlane.xlu0 %385
    %v387 = vsub.f32 %v384, %v386
    %v388 = vmul.f32 %v387, 1.442695
    %v389 = vpow.pop %v388
    %390 = vadd.xlane.f32.xlu0 %v389
    %v391 = vpop.xlane.xlu0 %390
    %v392 = vlog2.pop %v391
    %v393 = vmul.f32 %v392, 0.6931472
    %v394 = vadd.f32 %v386, %v393
    %v395 = vsub.f32 %v378, %v394
    %v396 = vsel %vm383, %v395, %v378
    %397 = vst [vmem:[%s2] sm:$0xff] %v396
    // Predicated region
    $region14: #{forward.1} parent=1 // pred_check
      _
    $region15: #{forward.1} parent=1 // pred_check_branch
      %399 = sbr.rel (0) target = $region17
    $region16: #{forward.1} parent=1 // pred_region
      _
    $region17: #{forward.1} parent=1 // pred_fallthru
      _
    // Predicated region
    $region18: #{forward.1} parent=1 // pred_check
      _
    $region19: #{forward.1} parent=1 // pred_check_branch
      %401 = sbr.rel (0) target = $region21
    $region20: #{forward.1} parent=1 // pred_region
      _
    $region21: #{forward.1} parent=1 // pred_fallthru
      _
    %402 = vsyncpa [#allocation3], 1

</llo_original>
